<compile_context>
chip_gen: v6e
topology: v6e:2x2x1
jax: 0.10.0
libtpu: 0.0.40
codegen_flags: <defaults>
</compile_context>

<pallas_src>
import functools

import jax
import jax.numpy as jnp
import numpy as np
from jax.experimental import pallas as pl
from jax.experimental.pallas import tpu as pltpu

BATCH = 8
FEAT = 32        # in_features == out_features == num_features of the BN
BN_EPS = 1e-5
DECAY = 0.999

LANE = 128
SUBLANE = 8
# 2048 rows x 128 lanes x 4 B = 1 MiB per block.  3 slabs (2 inputs + aliased
# output) x 2 pipeline buffers x 1 MiB = 6 MiB: fits the default scoped-VMEM
# limit on every generation (16 MiB v5e, 32 MiB v6e/v7x).
MAX_BLOCK_ROWS = 2048


def _round_up(x, m):
    return (x + m - 1) // m * m


# ----------------------------------------------------------------------------
# Kernel 1: forward of the wrapped model (Linear -> BatchNorm1d eval, BN folded)
# ----------------------------------------------------------------------------
def _forward_kernel(x_ref, w_ref, b_ref, o_ref):
    # x: [Bp, Kp], w: [Kp, Np] (BN scale already folded in), b: [1, Np]
    o_ref[...] = (
        jnp.dot(x_ref[...], w_ref[...], preferred_element_type=jnp.float32)
        + b_ref[...]
    ).astype(o_ref.dtype)


@jax.jit
def model_forward(params, buffers, x):
    """y = BatchNorm1d_eval(Linear(x)), as one lane-dense matmul+bias kernel."""
    w = params["linear.weight"]                      # PyTorch layout [out, in]
    b = params["linear.bias"]
    scale = params["bn.weight"] * jax.lax.rsqrt(buffers["bn.running_var"] + BN_EPS)
    w_eff = w.T * scale[None, :]                     # [in, out], fused with scale
    b_eff = (b - buffers["bn.running_mean"]) * scale + params["bn.bias"]

    batch, f_in = x.shape
    f_out = w.shape[0]
    bp = _round_up(batch, SUBLANE)
    kp = _round_up(f_in, LANE)
    fp = _round_up(f_out, LANE)

    x_p = jnp.pad(x, ((0, bp - batch), (0, kp - f_in)))
    w_p = jnp.pad(w_eff, ((0, kp - f_in), (0, fp - f_out)))
    b_p = jnp.pad(b_eff, (0, fp - f_out)).reshape(1, fp)

    y = pl.pallas_call(
        _forward_kernel,
        out_shape=jax.ShapeDtypeStruct((bp, fp), jnp.float32),
    )(x_p, w_p, b_p)
    return y[:batch, :f_out]


# ----------------------------------------------------------------------------
# Kernel 2: fused EMA update over one flattened (rows, 128) slab
# ----------------------------------------------------------------------------
def _ema_kernel(decay, shadow_ref, model_ref, out_ref):
    # shadow <- decay * shadow + (1 - decay) * model
    out_ref[...] = decay * shadow_ref[...] + (1.0 - decay) * model_ref[...]


def _ema_pallas(shadow_slab, model_slab, decay, block_rows):
    rows = shadow_slab.shape[0]
    spec = pl.BlockSpec((block_rows, LANE), lambda i: (i, 0))
    return pl.pallas_call(
        functools.partial(_ema_kernel, decay),
        out_shape=jax.ShapeDtypeStruct(shadow_slab.shape, jnp.float32),
        grid_spec=pltpu.PrefetchScalarGridSpec(
            num_scalar_prefetch=0,
            grid=(rows // block_rows,),
            in_specs=[spec, spec],
            out_specs=spec,
        ),
        # Update the shadow slab in place (no separate output slab written).
        input_output_aliases={0: 0},
        # Fully elementwise -> shard the grid across v7x's two TensorCores.
        compiler_params=pltpu.CompilerParams(dimension_semantics=("parallel",)),
    )(shadow_slab, model_slab)


def _pack(leaves, rows):
    """Concat + zero-pad f32 leaves into a (rows, 128) slab."""
    flat = jnp.concatenate(
        [jnp.asarray(leaf, jnp.float32).reshape(-1) for leaf in leaves]
    )
    flat = jnp.pad(flat, (0, rows * LANE - flat.shape[0]))
    return flat.reshape(rows, LANE)


def _make_update_fn(decay, rows, block_rows):
    @functools.partial(jax.jit, donate_argnums=(0,))
    def update(shadow_slab, model_leaves):
        model_slab = _pack(model_leaves, rows)
        return _ema_pallas(shadow_slab, model_slab, decay, block_rows)

    return update


# ----------------------------------------------------------------------------
# EMA wrapper (mirrors the torch.nn.Module)
# ----------------------------------------------------------------------------
class EMA:
    def __init__(self, params, buffers, decay):
        self.decay = float(decay)
        self.params = dict(params)
        self.buffers = dict(buffers)

        self._param_keys = sorted(self.params.keys())
        self._ema_buf_keys = sorted(
            k for k in self.buffers if ("running_mean" in k or "running_var" in k)
        )
        self._copy_buf_keys = [
            k for k in sorted(self.buffers) if k not in self._ema_buf_keys
        ]
        self._ema_keys = self._param_keys + self._ema_buf_keys

        self._shapes = {k: tuple(self._model_value(k).shape) for k in self._ema_keys}
        self._sizes = [int(np.prod(self._shapes[k], dtype=np.int64)) for k in self._ema_keys]

        total = int(sum(self._sizes))
        rows_raw = int(pl.cdiv(total, LANE))
        self._block_rows = int(min(MAX_BLOCK_ROWS, _round_up(rows_raw, SUBLANE)))
        self._rows = int(_round_up(rows_raw, self._block_rows))

        # deepcopy-equivalent: shadow starts as a copy of the model state,
        # stored persistently in slab form (flattened ONCE, here).
        self.shadow_slab = _pack(
            [self._model_value(k) for k in self._ema_keys], self._rows
        )
        # Non-EMA buffers (num_batches_tracked): plain per-step copy, no kernel.
        self._shadow_other = {k: self.buffers[k] for k in self._copy_buf_keys}

        self._update_fn = _make_update_fn(self.decay, self._rows, self._block_rows)

    def _model_value(self, k):
        return self.params[k] if k in self.params else self.buffers[k]

    def update_ema(self):
        # Params + EMA'd buffers fused into ONE slab and ONE pallas_call.
        leaves = tuple(self._model_value(k) for k in self._ema_keys)
        self.shadow_slab = self._update_fn(self.shadow_slab, leaves)
        # Other buffers: plain copy_ (host-side scalar aliasing, no kernel).
        for k in self._copy_buf_keys:
            self._shadow_other[k] = self.buffers[k]

    def _unflatten(self, keys):
        flat = self.shadow_slab.reshape(-1)
        out, off = {}, 0
        for k, sz in zip(self._ema_keys, self._sizes):
            if k in keys:
                like = self._model_value(k)
                out[k] = flat[off : off + sz].reshape(self._shapes[k]).astype(like.dtype)
            off += sz
        return out

    @property
    def shadow_params(self):
        return self._unflatten(set(self._param_keys))

    @property
    def shadow_buffers(self):
        out = self._unflatten(set(self._ema_buf_keys))
        out.update(self._shadow_other)
        return out

    def forward(self, x):
        """Forward original (non-shadow) params by default."""
        return model_forward(self.params, self.buffers, x)


# ----------------------------------------------------------------------------
if __name__ == "__main__":
    key = jax.random.PRNGKey(0)
    kx, kw, kb, kg, kbt, krm, krv, kpert = jax.random.split(key, 8)

    # synthetic model: Linear(32, 32) + BatchNorm1d(32)
    params = {
        "linear.weight": jax.random.normal(kw, (FEAT, FEAT), jnp.float32) * 0.1,
        "linear.bias": jax.random.normal(kb, (FEAT,), jnp.float32) * 0.1,
        "bn.weight": 1.0 + 0.01 * jax.random.normal(kg, (FEAT,), jnp.float32),
        "bn.bias": 0.01 * jax.random.normal(kbt, (FEAT,), jnp.float32),
    }
    buffers = {
        "bn.running_mean": 0.1 * jax.random.normal(krm, (FEAT,), jnp.float32),
        "bn.running_var": 1.0 + 0.1 * jnp.abs(jax.random.normal(krv, (FEAT,), jnp.float32)),
        "bn.num_batches_tracked": jnp.asarray(3, jnp.int32),
    }

    ema = EMA(params, buffers, DECAY)

    # simulate one training step having moved the model away from the shadow
    ema.params = {
        k: v + 0.05 * jax.random.normal(jax.random.fold_in(kpert, i), v.shape, v.dtype)
        for i, (k, v) in enumerate(sorted(params.items()))
    }

    # forward pass (Pallas matmul+bias kernel, BN folded)
    x = jax.random.normal(kx, (BATCH, FEAT), jnp.float32)
    y = jax.block_until_ready(ema.forward(x))

    # EMA update (single fused Pallas elementwise kernel over the slab)
    ema.update_ema()
    shadow_params = jax.tree_util.tree_map(jax.block_until_ready, ema.shadow_params)
    shadow_buffers = jax.tree_util.tree_map(jax.block_until_ready, ema.shadow_buffers)

    # reference checks
    y_ref = x @ ema.params["linear.weight"].T + ema.params["linear.bias"]
    y_ref = (y_ref - buffers["bn.running_mean"]) * jax.lax.rsqrt(
        buffers["bn.running_var"] + BN_EPS
    ) * ema.params["bn.weight"] + ema.params["bn.bias"]
    np.testing.assert_allclose(np.asarray(y), np.asarray(y_ref), rtol=1e-4, atol=1e-5)

    for k in params:
        ref = params[k] - (1.0 - DECAY) * (params[k] - ema.params[k])
        np.testing.assert_allclose(
            np.asarray(shadow_params[k]), np.asarray(ref), rtol=1e-5, atol=1e-6
        )
    for k in ("bn.running_mean", "bn.running_var"):
        np.testing.assert_allclose(
            np.asarray(shadow_buffers[k]), np.asarray(buffers[k]), rtol=1e-5, atol=1e-6
        )
    assert int(shadow_buffers["bn.num_batches_tracked"]) == 3

    print("KERNEL_OK")
</pallas_src>

<mosaic_0001>
module attributes {stable_mosaic.version = 11 : i64} {
  func.func @_forward_kernel(%arg0: memref<8x128xf32, #tpu.memory_space<vmem>>, %arg1: memref<128x128xf32, #tpu.memory_space<vmem>>, %arg2: memref<1x128xf32, #tpu.memory_space<vmem>>, %arg3: memref<8x128xf32, #tpu.memory_space<vmem>>) attributes {dimension_semantics = [], scalar_prefetch = 0 : i64, scratch_operands = 0 : i64, tpu.core_type = #tpu.core_type<tc>} {
    %c0 = arith.constant 0 : index
    %c0_0 = arith.constant 0 : index
    %0 = vector.load %arg0[%c0, %c0_0] : memref<8x128xf32, #tpu.memory_space<vmem>>, vector<8x128xf32>
    %c0_1 = arith.constant 0 : index
    %c0_2 = arith.constant 0 : index
    %1 = vector.load %arg1[%c0_1, %c0_2] : memref<128x128xf32, #tpu.memory_space<vmem>>, vector<128x128xf32>
    %cst = arith.constant dense<0.000000e+00> : vector<8x128xf32>
    %2 = tpu.matmul %0, %1, %cst {dimension_numbers = #tpu.dot_dimension_numbers<[1], [0], [0], [1], [0, 0, 1, 1], [], []>} : vector<8x128xf32>, vector<128x128xf32>, vector<8x128xf32> -> vector<8x128xf32>
    %c0_3 = arith.constant 0 : index
    %c0_4 = arith.constant 0 : index
    %3 = vector.load %arg2[%c0_3, %c0_4] : memref<1x128xf32, #tpu.memory_space<vmem>>, vector<1x128xf32>
    %4 = vector.broadcast %3 : vector<1x128xf32> to vector<8x128xf32>
    %5 = arith.addf %2, %4 : vector<8x128xf32>
    %c0_5 = arith.constant 0 : index
    %c0_6 = arith.constant 0 : index
    %6 = vector.load %arg3[%c0_5, %c0_6] : memref<8x128xf32, #tpu.memory_space<vmem>>, vector<8x128xf32>
    tpu.vector_store %arg3[%c0_5, %c0_6], %5 {strides = array<i32>} : memref<8x128xf32, #tpu.memory_space<vmem>>, vector<8x128xf32>,
    return
  }
}

</mosaic_0001>

<llo_original>
// kernel: model_forward.1
$region0: #{model_forward.1}
  #allocation0 [shape = 'u32[]', space=smem, size = 0x4, offset = 0x4, fixed_abs, tag = 'smem constant byte address 0x4 - core index']
  #allocation1 [shape = 'u32[144,128]{1,0:T(1,128)}', space=vmem, size = 0x12000, scoped, tag = 'internal scratch']
  %s0 = inlined_call_operand.vmem [shape: f32[8,128], index: 0, kind: input, shape index: {}]
  %s1 = inlined_call_operand.vmem [shape: f32[128,128], index: 1, kind: input, shape index: {}]
  %s2 = inlined_call_operand.vmem [shape: f32[1,128], index: 2, kind: input, shape index: {}]
  %s3 = inlined_call_operand.hbm [shape: f32[8,128], index: 3, kind: output, shape index: {}]
  %s4 = sld [smem:[#allocation0]]
  $region22: #{model_forward.1} parent=0
    _
  %s6 = ssub.s32 1, %s4
  %s7 = scalar_select 0, %s6, %s4
  $region1: #{model_forward.1} parent=0
    #allocation2 [shape = 'u8[4096]{0}', space=vmem, size = 0x1000, scoped, tag = 'output window, operand 0, single buffered']
    #allocation3 [shape = 's32[1]{0}', space=sflag, size = 0x4, scoped, tag = 'scoped memory for model_forward.1']
    %8 = vsyncpa [#allocation3], 0
    // Predicated region
    $region2: #{model_forward.1} parent=1 // pred_check
      _
    $region3: #{model_forward.1} parent=1 // pred_check_branch
      %10 = sbr.rel (0) target = $region5
    $region4: #{model_forward.1} parent=1 // pred_region
      _
    $region5: #{model_forward.1} parent=1 // pred_fallthru
      _
    // Predicated region
    $region6: #{model_forward.1} parent=1 // pred_check
      _
    $region7: #{model_forward.1} parent=1 // pred_check_branch
      %12 = sbr.rel (0) target = $region9
    $region8: #{model_forward.1} parent=1 // pred_region
      _
    $region9: #{model_forward.1} parent=1 // pred_fallthru
      _
    // Predicated region
    $region10: #{model_forward.1} parent=1 // pred_check
      _
    $region11: #{model_forward.1} parent=1 // pred_check_branch
      %14 = sbr.rel (0) target = $region13
    $region12: #{model_forward.1} parent=1 // pred_region
      _
    $region13: #{model_forward.1} parent=1 // pred_fallthru
      _
    %v15 = vld [vmem:[%s0] sm:$0xff]
    %v16 = vld [vmem:[%s1] sm:$0xff]
    %v17 = vld [vmem:[%s1 + $0x8] sm:$0xff]
    %v18 = vld [vmem:[%s1 + $0x10] sm:$0xff]
    %v19 = vld [vmem:[%s1 + $0x18] sm:$0xff]
    %v20 = vld [vmem:[%s1 + $0x20] sm:$0xff]
    %v21 = vld [vmem:[%s1 + $0x28] sm:$0xff]
    %v22 = vld [vmem:[%s1 + $0x30] sm:$0xff]
    %v23 = vld [vmem:[%s1 + $0x38] sm:$0xff]
    %v24 = vld [vmem:[%s1 + $0x40] sm:$0xff]
    %v25 = vld [vmem:[%s1 + $0x48] sm:$0xff]
    %v26 = vld [vmem:[%s1 + $0x50] sm:$0xff]
    %v27 = vld [vmem:[%s1 + $0x58] sm:$0xff]
    %v28 = vld [vmem:[%s1 + $0x60] sm:$0xff]
    %v29 = vld [vmem:[%s1 + $0x68] sm:$0xff]
    %v30 = vld [vmem:[%s1 + $0x70] sm:$0xff]
    %v31 = vld [vmem:[%s1 + $0x78] sm:$0xff]
    %v32 = vld [vmem:[%s2] sm:$0x1]
    %v34 = vlaneseq
    %v35 = vshrl.u32 %v34, 7
    %v36 = vsub.s32 0, %v35
    %v37 = vrot.slane %v32, %v36
    %39 = vmatprep.subr.mxu0 0.0
    %40 = vmatpush1.msra.mxu0 %v31
    %41 = vmatprep.subr.mxu0 0.0
    %42 = vmatpush1.msra.mxu0 %v30
    %43 = vmatprep.subr.mxu0 0.0
    %44 = vmatpush1.msra.mxu0 %v29
    %45 = vmatprep.subr.mxu0 0.0
    %46 = vmatpush1.msra.mxu0 %v28
    %47 = vmatprep.subr.mxu0 0.0
    %48 = vmatpush1.msra.mxu0 %v27
    %49 = vmatprep.subr.mxu0 0.0
    %50 = vmatpush1.msra.mxu0 %v26
    %51 = vmatprep.subr.mxu0 0.0
    %52 = vmatpush1.msra.mxu0 %v25
    %53 = vmatprep.subr.mxu0 0.0
    %54 = vmatpush1.msra.mxu0 %v24
    %55 = vmatprep.subr.mxu0 0.0
    %56 = vmatpush1.msra.mxu0 %v23
    %57 = vmatprep.subr.mxu0 0.0
    %58 = vmatpush1.msra.mxu0 %v22
    %59 = vmatprep.subr.mxu0 0.0
    %60 = vmatpush1.msra.mxu0 %v21
    %61 = vmatprep.subr.mxu0 0.0
    %62 = vmatpush1.msra.mxu0 %v20
    %63 = vmatprep.subr.mxu0 0.0
    %64 = vmatpush1.msra.mxu0 %v19
    %65 = vmatprep.subr.mxu0 0.0
    %66 = vmatpush1.msra.mxu0 %v18
    %67 = vmatprep.subr.mxu0 0.0
    %68 = vmatpush1.msra.mxu0 %v17
    %69 = vmatprep.subr.mxu0 0.0
    %70 = vmatpush1.msra.mxu0 %v16
    %71 = vmatprep.subr.mxu0 0.0
    %72 = vmatpush2.msra.mxu0 0.0
    %73 = vmatprep.subr.mxu0 0.0
    %74 = vmatpush2.msra.mxu0 0.0
    %75 = vmatprep.subr.mxu0 0.0
    %76 = vmatpush2.msra.mxu0 0.0
    %77 = vmatprep.subr.mxu0 0.0
    %78 = vmatpush2.msra.mxu0 0.0
    %79 = vmatprep.subr.mxu0 0.0
    %80 = vmatpush2.msra.mxu0 0.0
    %81 = vmatprep.subr.mxu0 0.0
    %82 = vmatpush2.msra.mxu0 0.0
    %83 = vmatprep.subr.mxu0 0.0
    %84 = vmatpush2.msra.mxu0 0.0
    %85 = vmatprep.subr.mxu0 0.0
    %86 = vmatpush2.msra.mxu0 0.0
    %87 = vmatprep.subr.mxu0 0.0
    %88 = vmatpush2.msra.mxu0 0.0
    %89 = vmatprep.subr.mxu0 0.0
    %90 = vmatpush2.msra.mxu0 0.0
    %91 = vmatprep.subr.mxu0 0.0
    %92 = vmatpush2.msra.mxu0 0.0
    %93 = vmatprep.subr.mxu0 0.0
    %94 = vmatpush2.msra.mxu0 0.0
    %95 = vmatprep.subr.mxu0 0.0
    %96 = vmatpush2.msra.mxu0 0.0
    %97 = vmatprep.subr.mxu0 0.0
    %98 = vmatpush2.msra.mxu0 0.0
    %99 = vmatprep.subr.mxu0 0.0
    %100 = vmatpush2.msra.mxu0 0.0
    %101 = vmatprep.subr.mxu0 0.0
    %102 = vmatpush2.msra.mxu0 0.0
    %103 = vmatprep.mubr.f32.mxu0 0.0
    %104 = vmatmul.mubr.f32.gmra.mxu0 %v15
    %v105 = vpop.f32.mrf.mxu0
    %v106 = vadd.f32 %v37, %v105
    %v107 = vpop.f32.mrf.mxu0
    %108 = vdwg.mxu0
    %109 = vst [vmem:[#allocation2] sm:$0xff] %v106
    // Predicated region
    $region14: #{model_forward.1} parent=1 // pred_check
      _
    $region15: #{model_forward.1} parent=1 // pred_check_branch
      %111 = sbr.rel (0) target = $region17
    $region16: #{model_forward.1} parent=1 // pred_region
      %s113 = ssub.s32 128, 128
      %114 = vsyncadd [#allocation3], %s113
      %s116 = sshll.u32 [#allocation2], 4
      %s117 = int_to_ptr.vmem [resolvable:$true] %s116
      %119 = dma.vmem_to_hbm [thread:$0]  %s117, 128, %s3, [#allocation3]
    $region17: #{model_forward.1} parent=1 // pred_fallthru
      _
    // Predicated region
    $region18: #{model_forward.1} parent=1 // pred_check
      _
    $region19: #{model_forward.1} parent=1 // pred_check_branch
      %121 = sbr.rel (0) target = $region21
    $region20: #{model_forward.1} parent=1 // pred_region
      %122 = dma.done [#allocation3], 128
    $region21: #{model_forward.1} parent=1 // pred_fallthru
      _
    %123 = vsyncpa [#allocation3], 1

</llo_original>
